<compile_context>
chip_gen: v7x
topology: tpu7x:2x2x1
jax: 0.10.0
libtpu: 0.0.40
codegen_flags: <defaults>
</compile_context>

<pallas_src>
import functools
import math

import jax
import jax.numpy as jnp
from jax.experimental import pallas as pl
from jax.experimental.pallas import tpu as pltpu

EPS = 1e-5


def _ln_math(x, w, b):
    # f32 accumulation regardless of input dtype (mandatory on v5e, safer everywhere).
    x = x.astype(jnp.float32)
    w = w.astype(jnp.float32)
    mean = jnp.mean(x, axis=-1, keepdims=True)
    mean_sq = jnp.mean(x * x, axis=-1, keepdims=True)
    var = jnp.maximum(mean_sq - mean * mean, 0.0)  # guard tiny negative from cancellation
    inv = jax.lax.rsqrt(var + EPS)                 # EUP rsqrt
    y = (x - mean) * inv * w
    if b is not None:
        y = y + b.astype(jnp.float32)
    return y


def _ln_kernel_bias(x_ref, w_ref, b_ref, o_ref):
    o_ref[...] = _ln_math(x_ref[...], w_ref[...], b_ref[...]).astype(o_ref.dtype)


def _ln_kernel_nobias(x_ref, w_ref, o_ref):
    o_ref[...] = _ln_math(x_ref[...], w_ref[...], None).astype(o_ref.dtype)


def _sublane_multiple(dtype):
    itemsize = jnp.dtype(dtype).itemsize
    return {4: 8, 2: 16, 1: 32}.get(itemsize, 8)


def _round_up(a, m):
    return ((a + m - 1) // m) * m


def _pick_row_tile(rows, D, dtype, target_block_bytes):
    """Pick a row tile giving ~target_block_bytes per input block (sublane aligned)."""
    sub = _sublane_multiple(dtype)
    itemsize = jnp.dtype(dtype).itemsize
    rt = (target_block_bytes // max(1, D * itemsize)) // sub * sub
    rt = max(sub, rt)
    # No point in a block taller than the (rounded-up) array.
    rt = min(rt, _round_up(rows, sub))
    # Keep the row grid multi-step so v7x's two TensorCores both get work.
    if rows >= 4 * sub:
        rt = min(rt, _round_up(pl.cdiv(rows, 4), sub))
    return max(sub, rt)


@functools.partial(jax.jit, static_argnames=("row_tile",))
def _layer_norm_2d(x2, weight, bias, *, row_tile):
    rows, D = x2.shape
    itemsize = jnp.dtype(x2.dtype).itemsize
    has_bias = bias is not None

    grid = (pl.cdiv(rows, row_tile),)  # ragged last block; no host-side padding

    w2 = weight.reshape(1, D)
    operands = [x2, w2]
    in_specs = [
        pl.BlockSpec((row_tile, D), lambda i: (i, 0)),
        pl.BlockSpec((1, D), lambda i: (0, 0)),
    ]
    kernel = _ln_kernel_nobias
    if has_bias:
        operands.append(bias.reshape(1, D))
        in_specs.append(pl.BlockSpec((1, D), lambda i: (0, 0)))
        kernel = _ln_kernel_bias

    # VMEM budget: double-buffered in + out blocks plus f32 compute temps.
    block_bytes = row_tile * D * itemsize
    f32_block_bytes = row_tile * D * 4
    vmem_est = 4 * block_bytes + 3 * f32_block_bytes + 4 * D * 4 + (2 << 20)
    vmem_limit = int(min(max(vmem_est, 32 << 20), 100 << 20))

    cost = pl.CostEstimate(
        flops=7 * rows * D,
        transcendentals=rows,
        bytes_accessed=2 * rows * D * itemsize,
    )

    return pl.pallas_call(
        kernel,
        out_shape=jax.ShapeDtypeStruct((rows, D), x2.dtype),
        grid_spec=pltpu.PrefetchScalarGridSpec(
            num_scalar_prefetch=0,
            grid=grid,
            in_specs=in_specs,
            out_specs=pl.BlockSpec((row_tile, D), lambda i: (i, 0)),
        ),
        compiler_params=pltpu.CompilerParams(
            dimension_semantics=("parallel",),
            vmem_limit_bytes=vmem_limit,
        ),
        cost_estimate=cost,
    )(*operands)


def layer_norm(x, weight, bias=None, *, row_tile=None, target_block_bytes=2 << 20):
    """LayerNorm over the last dim of `x` (any leading shape), like F.layer_norm."""
    orig_shape = x.shape
    D = orig_shape[-1]
    rows = int(math.prod(orig_shape[:-1]))  # prod(()) == 1 handles 1-D input
    x2 = x.reshape(rows, D)
    if row_tile is None:
        row_tile = _pick_row_tile(rows, D, x.dtype, target_block_bytes)
    # TODO(synk): if D is not a multiple of 128, lane utilization is D/128 of peak;
    # a lane-dense repack of the hidden axis would be needed to recover it.
    out = _layer_norm_2d(x2, weight, bias, row_tile=int(row_tile))
    return out.reshape(orig_shape)


if __name__ == "__main__":
    key = jax.random.PRNGKey(0)
    B, S, H = 2, 8, 32  # (batch, seq, hidden); normalize over hidden

    x = jax.random.normal(key, (B, S, H), dtype=jnp.float32)

    # Parameter init matching nn.Parameter(torch.ones/zeros(ndim))
    weight = jnp.ones((H,), dtype=jnp.float32)
    bias = jnp.zeros((H,), dtype=jnp.float32)

    def ref_ln(xr, w, b):
        mean = jnp.mean(xr, axis=-1, keepdims=True)
        var = jnp.mean((xr - mean) ** 2, axis=-1, keepdims=True)
        y = (xr - mean) * jax.lax.rsqrt(var + EPS) * w
        return y + b if b is not None else y

    # bias=True path
    out = jax.block_until_ready(layer_norm(x, weight, bias))
    assert jnp.allclose(out, ref_ln(x, weight, bias), atol=1e-5, rtol=1e-5), "bias path mismatch"

    # bias=False path (module constructed with bias=False)
    out_nb = jax.block_until_ready(layer_norm(x, weight, None))
    assert jnp.allclose(out_nb, ref_ln(x, weight, None), atol=1e-5, rtol=1e-5), "no-bias path mismatch"

    # Non-divisible row count: exercises the pad-free ragged tail block.
    x3 = jax.random.normal(jax.random.PRNGKey(1), (3, 5, H), dtype=jnp.float32)
    out3 = jax.block_until_ready(layer_norm(x3, weight, bias))
    assert jnp.allclose(out3, ref_ln(x3, weight, bias), atol=1e-5, rtol=1e-5), "ragged rows mismatch"

    print("KERNEL_OK")
</pallas_src>

<mosaic_0001>
module attributes {stable_mosaic.version = 11 : i64} {
  func.func @_ln_kernel_bias(%arg0: i32, %arg1: memref<16x32xf32, #tpu.memory_space<vmem>>, %arg2: memref<1x32xf32, #tpu.memory_space<vmem>>, %arg3: memref<1x32xf32, #tpu.memory_space<vmem>>, %arg4: memref<16x32xf32, #tpu.memory_space<vmem>>) attributes {dimension_semantics = [#tpu.dimension_semantics<parallel>], iteration_bounds = array<i64: 1>, scalar_prefetch = 0 : i64, scratch_operands = 0 : i64, tpu.core_type = #tpu.core_type<tc>, window_params = [{transform_indices = @transform_0, window_bounds = array<i64: 16, 32>}, {pipeline_mode = #tpu.pipeline_mode<synchronous>, transform_indices = @transform_1, window_bounds = array<i64: 1, 32>}, {pipeline_mode = #tpu.pipeline_mode<synchronous>, transform_indices = @transform_2, window_bounds = array<i64: 1, 32>}, {transform_indices = @transform_3, window_bounds = array<i64: 16, 32>}]} {
    %c0 = arith.constant 0 : index
    %c0_0 = arith.constant 0 : index
    %0 = vector.load %arg1[%c0, %c0_0] : memref<16x32xf32, #tpu.memory_space<vmem>>, vector<16x32xf32>
    %c0_1 = arith.constant 0 : index
    %c0_2 = arith.constant 0 : index
    %1 = vector.load %arg2[%c0_1, %c0_2] : memref<1x32xf32, #tpu.memory_space<vmem>>, vector<1x32xf32>
    %c0_3 = arith.constant 0 : index
    %c0_4 = arith.constant 0 : index
    %2 = vector.load %arg3[%c0_3, %c0_4] : memref<1x32xf32, #tpu.memory_space<vmem>>, vector<1x32xf32>
    %cst = arith.constant dense<0.000000e+00> : vector<16xf32>
    %3 = vector.multi_reduction <add>, %0, %cst [1] : vector<16x32xf32> to vector<16xf32>
    %4 = vector.shape_cast %3 : vector<16xf32> to vector<16x1xf32>
    %cst_5 = arith.constant 3.200000e+01 : f32
    %5 = vector.broadcast %cst_5 : f32 to vector<16x1xf32>
    %6 = arith.divf %4, %5 : vector<16x1xf32>
    %7 = arith.mulf %0, %0 : vector<16x32xf32>
    %cst_6 = arith.constant dense<0.000000e+00> : vector<16xf32>
    %8 = vector.multi_reduction <add>, %7, %cst_6 [1] : vector<16x32xf32> to vector<16xf32>
    %9 = vector.shape_cast %8 : vector<16xf32> to vector<16x1xf32>
    %cst_7 = arith.constant 3.200000e+01 : f32
    %10 = vector.broadcast %cst_7 : f32 to vector<16x1xf32>
    %11 = arith.divf %9, %10 : vector<16x1xf32>
    %12 = arith.mulf %6, %6 : vector<16x1xf32>
    %13 = arith.subf %11, %12 : vector<16x1xf32>
    %cst_8 = arith.constant 0.000000e+00 : f32
    %14 = vector.broadcast %cst_8 : f32 to vector<16x1xf32>
    %15 = arith.maximumf %13, %14 : vector<16x1xf32>
    %cst_9 = arith.constant 9.99999974E-6 : f32
    %16 = vector.broadcast %cst_9 : f32 to vector<16x1xf32>
    %17 = arith.addf %15, %16 : vector<16x1xf32>
    %18 = math.rsqrt %17 : vector<16x1xf32>
    %19 = vector.broadcast %6 : vector<16x1xf32> to vector<16x32xf32>
    %20 = arith.subf %0, %19 : vector<16x32xf32>
    %21 = vector.broadcast %18 : vector<16x1xf32> to vector<16x32xf32>
    %22 = arith.mulf %20, %21 : vector<16x32xf32>
    %23 = vector.broadcast %1 : vector<1x32xf32> to vector<16x32xf32>
    %24 = arith.mulf %22, %23 : vector<16x32xf32>
    %25 = vector.broadcast %2 : vector<1x32xf32> to vector<16x32xf32>
    %26 = arith.addf %24, %25 : vector<16x32xf32>
    %c0_10 = arith.constant 0 : index
    %c0_11 = arith.constant 0 : index
    %27 = vector.load %arg4[%c0_10, %c0_11] : memref<16x32xf32, #tpu.memory_space<vmem>>, vector<16x32xf32>
    tpu.vector_store %arg4[%c0_10, %c0_11], %26 {strides = array<i32>} : memref<16x32xf32, #tpu.memory_space<vmem>>, vector<16x32xf32>,
    return
  }
  func.func @transform_0(%arg0: i32) -> (i32, i32) {
    %c0_i32 = arith.constant 0 : i32
    %c0_i32_0 = arith.constant 0 : i32
    return %arg0, %c0_i32 : i32, i32
  }
  func.func @transform_1(%arg0: i32) -> (i32, i32) {
    %c0_i32 = arith.constant 0 : i32
    %c0_i32_0 = arith.constant 0 : i32
    %c0_i32_1 = arith.constant 0 : i32
    return %c0_i32, %c0_i32_0 : i32, i32
  }
  func.func @transform_2(%arg0: i32) -> (i32, i32) {
    %c0_i32 = arith.constant 0 : i32
    %c0_i32_0 = arith.constant 0 : i32
    %c0_i32_1 = arith.constant 0 : i32
    return %c0_i32, %c0_i32_0 : i32, i32
  }
  func.func @transform_3(%arg0: i32) -> (i32, i32) {
    %c0_i32 = arith.constant 0 : i32
    %c0_i32_0 = arith.constant 0 : i32
    return %arg0, %c0_i32 : i32, i32
  }
}

</mosaic_0001>

<llo_original>
// kernel: _layer_norm_2d.1
$region0: #{_layer_norm_2d.1}
  #allocation0 [shape = 'u32[]', space=smem, size = 0x4, offset = 0x4, fixed_abs, tag = 'smem constant byte address 0x4 - core index']
  #allocation1 [shape = 'u32[144,128]{1,0:T(1,128)}', space=vmem, size = 0x12000, scoped, tag = 'internal scratch']
  %s0 = inlined_call_operand.hbm [shape: f32[16,32], index: 0, kind: input, shape index: {}]
  %s1 = inlined_call_operand.vmem [shape: f32[1,32], index: 1, kind: input, shape index: {}]
  %s2 = inlined_call_operand.vmem [shape: f32[1,32], index: 2, kind: input, shape index: {}]
  %s3 = inlined_call_operand.hbm [shape: f32[16,32], index: 3, kind: output, shape index: {}]
  %s4 = sld [smem:[#allocation0]]
  $region26: #{_layer_norm_2d.1} parent=0
    _
  %s6 = ssub.s32 1, %s4
  %s7 = scalar_select 0, %s6, %s4
  $region1: #{_layer_norm_2d.1} parent=0
    #allocation2 [shape = 'u8[8192]{0}', space=vmem, size = 0x2000, scoped, tag = 'input window, operand 0, single buffered']
    #allocation3 [shape = 's32[1]{0}', space=sflag, size = 0x4, scoped, tag = 'scoped memory for _layer_norm_2d.1']
    #allocation4 [shape = 's32[1]{0}', space=sflag, size = 0x4, scoped, tag = 'scoped memory for _layer_norm_2d.1']
    #allocation5 [shape = 'u8[8192]{0}', space=vmem, size = 0x2000, scoped, tag = 'output window, operand 0, single buffered']
    %8 = vsyncpa [#allocation3], 0
    %9 = vsyncpa [#allocation4], 0
    // Predicated region
    $region2: #{_layer_norm_2d.1} parent=1 // pred_check
      _
    $region3: #{_layer_norm_2d.1} parent=1 // pred_check_branch
      %11 = sbr.rel (0) target = $region5
    $region4: #{_layer_norm_2d.1} parent=1 // pred_region
      %s13 = ssub.s32 256, 256
      %14 = vsyncadd [#allocation3], %s13
      %s15 = sshll.u32 [#allocation2], 4
      %s16 = int_to_ptr.vmem [resolvable:$true] %s15
      %21 = dma.hbm_to_vmem [thread:$0]  %s0, 256, %s16, [#allocation3], 128, 128, 8
    $region5: #{_layer_norm_2d.1} parent=1 // pred_fallthru
      _
    // Predicated region
    $region6: #{_layer_norm_2d.1} parent=1 // pred_check
      _
    $region7: #{_layer_norm_2d.1} parent=1 // pred_check_branch
      %23 = sbr.rel (0) target = $region9
    $region8: #{_layer_norm_2d.1} parent=1 // pred_region
      _
    $region9: #{_layer_norm_2d.1} parent=1 // pred_fallthru
      _
    // Predicated region
    $region10: #{_layer_norm_2d.1} parent=1 // pred_check
      _
    $region11: #{_layer_norm_2d.1} parent=1 // pred_check_branch
      %25 = sbr.rel (0) target = $region13
    $region12: #{_layer_norm_2d.1} parent=1 // pred_region
      _
    $region13: #{_layer_norm_2d.1} parent=1 // pred_fallthru
      _
    // Predicated region
    $region14: #{_layer_norm_2d.1} parent=1 // pred_check
      _
    $region15: #{_layer_norm_2d.1} parent=1 // pred_check_branch
      %27 = sbr.rel (0) target = $region17
    $region16: #{_layer_norm_2d.1} parent=1 // pred_region
      %28 = dma.done [#allocation3], 256
    $region17: #{_layer_norm_2d.1} parent=1 // pred_fallthru
      _
    %v29 = vld [vmem:[#allocation2] sm:$0xff]
    %v30 = vld [vmem:[#allocation2 + $0x8] sm:$0xff]
    %v31 = vld [vmem:[%s1] sm:$0x1]
    %v32 = vld [vmem:[%s2] sm:$0x1]
    %vm33 = vcmask 261120
    %v34 = vsel %vm33, %v29, 0.0
    %35 = vadd.xlane.f32.xlu0 %v34
    %v36 = vpop.xlane.xlu0 %35
    %v37 = vsel %vm33, %v30, 0.0
    %38 = vadd.xlane.f32.xlu0 %v37
    %v39 = vpop.xlane.xlu0 %38
    %v40 = vrcp.pop 32.0
    %v41 = vmul.f32 %v36, %v40
    %v42 = vmul.f32 %v39, %v40
    %v43 = vmul.f32 %v29, %v29
    %v44 = vmul.f32 %v30, %v30
    %v45 = vsel %vm33, %v43, 0.0
    %46 = vadd.xlane.f32.xlu0 %v45
    %v47 = vpop.xlane.xlu0 %46
    %v48 = vsel %vm33, %v44, 0.0
    %49 = vadd.xlane.f32.xlu0 %v48
    %v50 = vpop.xlane.xlu0 %49
    %v51 = vmul.f32 %v47, %v40
    %v52 = vmul.f32 %v50, %v40
    %v53 = vmul.f32 %v41, %v41
    %v54 = vmul.f32 %v42, %v42
    %v55 = vsub.f32 %v51, %v53
    %v56 = vsub.f32 %v52, %v54
    %v57 = vmax.f32 %v55, 0.0
    %v58 = vmax.f32 %v56, 0.0
    %v59 = vadd.f32 %v57, 1e-05
    %v60 = vadd.f32 %v58, 1e-05
    %v61 = vrsqrt.pop %v59
    %v62 = vrsqrt.pop %v60
    %v63 = vsub.f32 %v29, %v41
    %v64 = vsub.f32 %v30, %v42
    %v65 = vmul.f32 %v63, %v61
    %v66 = vmul.f32 %v64, %v62
    %v68 = vlaneseq
    %v69 = vshrl.u32 %v68, 7
    %v70 = vsub.s32 0, %v69
    %v71 = vrot.slane %v31, %v70
    %v73 = vmul.f32 %v65, %v71
    %v74 = vmul.f32 %v66, %v71
    %v76 = vlaneseq
    %v77 = vshrl.u32 %v76, 7
    %v78 = vsub.s32 0, %v77
    %v79 = vrot.slane %v32, %v78
    %v81 = vadd.f32 %v73, %v79
    %v82 = vadd.f32 %v74, %v79
    %83 = vst.msk [vmem:[#allocation5] sm:$0xff] %vm33, %v81
    %84 = vst.msk [vmem:[#allocation5 + $0x8] sm:$0xff] %vm33, %v82
    // Predicated region
    $region18: #{_layer_norm_2d.1} parent=1 // pred_check
      _
    $region19: #{_layer_norm_2d.1} parent=1 // pred_check_branch
      %86 = sbr.rel (0) target = $region21
    $region20: #{_layer_norm_2d.1} parent=1 // pred_region
      %s88 = ssub.s32 256, 256
      %89 = vsyncadd [#allocation4], %s88
      %s90 = sshll.u32 [#allocation5], 4
      %s91 = int_to_ptr.vmem [resolvable:$true] %s90
      %96 = dma.vmem_to_hbm [thread:$0]  %s91, 256, %s3, [#allocation4], 128, 128, 8
    $region21: #{_layer_norm_2d.1} parent=1 // pred_fallthru
      _
    // Predicated region
    $region22: #{_layer_norm_2d.1} parent=1 // pred_check
      _
    $region23: #{_layer_norm_2d.1} parent=1 // pred_check_branch
      %98 = sbr.rel (0) target = $region25
    $region24: #{_layer_norm_2d.1} parent=1 // pred_region
      %99 = dma.done [#allocation4], 256
    $region25: #{_layer_norm_2d.1} parent=1 // pred_fallthru
      _
    %100 = vsyncpa [#allocation3], 1
    %101 = vsyncpa [#allocation4], 1

</llo_original>
